<compile_context>
chip_gen: v5e
topology: v5e:2x2
jax: 0.10.0
libtpu: 0.0.40
codegen_flags: <defaults>
</compile_context>

<pallas_src>
import math

import jax
import jax.numpy as jnp
from jax.experimental import pallas as pl
from jax.experimental.pallas import tpu as pltpu


# ----------------------------------------------------------------------------
# Tunables
# ----------------------------------------------------------------------------
_MAX_LANE_WIDTH = 1024                    # lane-packed width target (512-1024)
_TARGET_BLOCK_BYTES = 4 * 1024 * 1024     # ~4 MiB per-stream block
_VMEM_LIMIT_BYTES = 32 * 1024 * 1024      # safe on v5e/v6e/v7x


# ----------------------------------------------------------------------------
# Kernels
# ----------------------------------------------------------------------------
def _bn_sparse_kernel(x_ref, p_ref, nonsparse_ref, sparse_ref):
    """BatchNorm (folded scale/shift) + sparsity mask; emits nonsparse too.

    x_ref:         (TL, LW) tile of the lane-packed input
    p_ref:         (3,  LW) packed params: row0=scale, row1=shift, row2=threshold
    nonsparse_ref: (TL, LW) batch-normed values
    sparse_ref:    (TL, LW) thresholded values
    """
    x = x_ref[...].astype(jnp.float32)
    y = x * p_ref[0:1, :] + p_ref[1:2, :]               # BatchNorm1d (eval)
    nonsparse_ref[...] = y.astype(nonsparse_ref.dtype)  # "nonsparse_motifs"
    sparse_ref[...] = jnp.where(y > p_ref[2:3, :], y, 0.0).astype(sparse_ref.dtype)


def _bn_sparse_kernel_sparse_only(x_ref, p_ref, sparse_ref):
    """Inference path: no nonsparse intermediate write (1/3 less HBM traffic)."""
    x = x_ref[...].astype(jnp.float32)
    y = x * p_ref[0:1, :] + p_ref[1:2, :]
    sparse_ref[...] = jnp.where(y > p_ref[2:3, :], y, 0.0).astype(sparse_ref.dtype)


def _bn_sparse_concat_kernel(sp_ref, x_ref, p_ref, out_ref):
    """Fused inference path: BN + sparsify + concat splicepoint channels.

    sp_ref:  (TL, C_sp)  splicepoint channels (pass-through)
    x_ref:   (TL, C)     motif channels
    p_ref:   (3,  C)     scale / shift / threshold
    out_ref: (TL, C_sp + C)
    """
    x = x_ref[...].astype(jnp.float32)
    y = x * p_ref[0:1, :] + p_ref[1:2, :]
    s = jnp.where(y > p_ref[2:3, :], y, 0.0)
    sp = sp_ref[...].astype(jnp.float32)
    out_ref[...] = jnp.concatenate([sp, s], axis=-1).astype(out_ref.dtype)


# ----------------------------------------------------------------------------
# Tiling helpers
# ----------------------------------------------------------------------------
def _row_tile(rows, lane_width, itemsize, block_bytes):
    """Rows per block: ~block_bytes per stream, rounded to the sublane multiple."""
    mult = max(8, 8 * (4 // max(itemsize, 1)))   # 8 (f32) / 16 (bf16) / 32 (int8)
    max_rows = block_bytes // (lane_width * itemsize)
    max_rows = max((max_rows // mult) * mult, mult)
    return rows if rows <= max_rows else max_rows


def _choose_lane_width(total_elems, num_channels):
    """Largest lw = m * lcm(C, 128) with lw <= ~_MAX_LANE_WIDTH and total % lw == 0.

    Returns None when even lcm(C, 128) does not divide the element count
    (caller falls back to an unpacked (rows, C) view).
    """
    lcm = num_channels * 128 // math.gcd(num_channels, 128)
    if total_elems <= 0 or total_elems % lcm != 0:
        return None
    cap = max(lcm, _MAX_LANE_WIDTH)
    best = lcm
    m = 2
    while m * lcm <= cap:
        if total_elems % (m * lcm) == 0:
            best = m * lcm
        m += 1
    return best


def _compiler_params():
    return pltpu.CompilerParams(
        dimension_semantics=("parallel",),
        vmem_limit_bytes=_VMEM_LIMIT_BYTES,
    )


# ----------------------------------------------------------------------------
# pallas_call wrappers
# ----------------------------------------------------------------------------
def _run_bn_sparse(x2d, params3, *, collect_intermediates,
                   block_bytes=_TARGET_BLOCK_BYTES):
    """x2d: (rows, lane_width) lane-packed view; params3: (3, lane_width) f32."""
    rows, lw = x2d.shape
    tl = _row_tile(rows, lw, x2d.dtype.itemsize, block_bytes)
    grid = (pl.cdiv(rows, tl),)

    x_spec = pl.BlockSpec((tl, lw), lambda r: (r, 0))
    p_spec = pl.BlockSpec((3, lw), lambda r: (0, 0))     # constant -> VMEM resident
    out_spec = pl.BlockSpec((tl, lw), lambda r: (r, 0))

    if collect_intermediates:
        nonsparse, sparse = pl.pallas_call(
            _bn_sparse_kernel,
            out_shape=(
                jax.ShapeDtypeStruct((rows, lw), x2d.dtype),
                jax.ShapeDtypeStruct((rows, lw), x2d.dtype),
            ),
            grid_spec=pltpu.PrefetchScalarGridSpec(
                num_scalar_prefetch=0,
                grid=grid,
                in_specs=[x_spec, p_spec],
                out_specs=(out_spec, out_spec),
            ),
            compiler_params=_compiler_params(),
        )(x2d, params3)
        return nonsparse, sparse

    sparse = pl.pallas_call(
        _bn_sparse_kernel_sparse_only,
        out_shape=jax.ShapeDtypeStruct((rows, lw), x2d.dtype),
        grid_spec=pltpu.PrefetchScalarGridSpec(
            num_scalar_prefetch=0,
            grid=grid,
            in_specs=[x_spec, p_spec],
            out_specs=out_spec,
        ),
        compiler_params=_compiler_params(),
    )(x2d, params3)
    return None, sparse


def _run_bn_sparse_concat(sp2d, x2d, params3, *, block_bytes=_TARGET_BLOCK_BYTES):
    """Fused inference path. sp2d: (rows, C_sp); x2d: (rows, C); params3: (3, C)."""
    rows, c = x2d.shape
    c_sp = sp2d.shape[1]
    c_total = c_sp + c
    tl = _row_tile(rows, c_total, x2d.dtype.itemsize, block_bytes)
    grid = (pl.cdiv(rows, tl),)

    out = pl.pallas_call(
        _bn_sparse_concat_kernel,
        out_shape=jax.ShapeDtypeStruct((rows, c_total), x2d.dtype),
        grid_spec=pltpu.PrefetchScalarGridSpec(
            num_scalar_prefetch=0,
            grid=grid,
            in_specs=[
                pl.BlockSpec((tl, c_sp), lambda r: (r, 0)),
                pl.BlockSpec((tl, c), lambda r: (r, 0)),
                pl.BlockSpec((3, c), lambda r: (0, 0)),
            ],
            out_specs=pl.BlockSpec((tl, c_total), lambda r: (r, 0)),
        ),
        compiler_params=_compiler_params(),
    )(sp2d, x2d, params3)
    return out


# ----------------------------------------------------------------------------
# Module parameters (synthetic, deterministic)
# ----------------------------------------------------------------------------
class SparsityEnforcerParams:
    """Deterministically initialized parameters of the module (synthetic)."""

    def __init__(self, num_motifs, affine=False, eps=1e-5, seed=0):
        key = jax.random.PRNGKey(seed)
        k_mean, k_var, k_thr = jax.random.split(key, 3)
        self.num_motifs = num_motifs
        self.affine = affine
        self.eps = eps
        # BatchNorm1d running stats
        self.running_mean = 0.1 * jax.random.normal(k_mean, (num_motifs,), jnp.float32)
        self.running_var = 1.0 + 0.05 * jax.random.uniform(k_var, (num_motifs,), jnp.float32)
        # affine params (gamma=1, beta=0 when affine=False, matching PyTorch)
        self.gamma = jnp.ones((num_motifs,), jnp.float32)
        self.beta = jnp.zeros((num_motifs,), jnp.float32)
        # per-motif sparsity thresholds of the sparse layer
        self.thresholds = 0.5 + 0.5 * jax.random.uniform(k_thr, (num_motifs,), jnp.float32)


# ----------------------------------------------------------------------------
# Forward pass
# ----------------------------------------------------------------------------
def sparsity_enforcer_forward(params, x, splicepoint_results=None,
                              manipulate_post_sparse=None,
                              collect_intermediates=True,
                              block_bytes=_TARGET_BLOCK_BYTES):
    """JAX/Pallas equivalent of SparsityEnforcer.forward.

    x: (N, L, num_motifs)
    splicepoint_results: optional (N, L, C_sp) to concat on the channel axis.
    Returns (full_outputs: dict, out: array), like the PyTorch module.
    """
    N, L, C = x.shape
    assert C == params.num_motifs

    # Fold batch-norm (eval mode) into a single per-channel scale/shift (f32).
    inv_std = 1.0 / jnp.sqrt(params.running_var + params.eps)
    scale = (params.gamma * inv_std).astype(jnp.float32)
    shift = (params.beta - params.running_mean * params.gamma * inv_std).astype(jnp.float32)
    thresh = params.thresholds.astype(jnp.float32)

    rows = N * L

    # --- Fused splicepoint-concat inference path -----------------------------
    # Saves a full extra HBM round trip of post_sparse versus a separate concat.
    if (splicepoint_results is not None and manipulate_post_sparse is None
            and not collect_intermediates):
        C_sp = splicepoint_results.shape[2]
        params3 = jnp.stack([scale, shift, thresh], axis=0)       # (3, C)
        out2d = _run_bn_sparse_concat(
            splicepoint_results.reshape(rows, C_sp),
            x.reshape(rows, C),
            params3,
            block_bytes=block_bytes,
        )
        return {}, out2d.reshape(N, L, C_sp + C)

    # --- Lane-packed path -----------------------------------------------------
    lw = _choose_lane_width(rows * C, C)
    if lw is None:
        # TODO(synk): pad the position count to a multiple of lcm(C,128)//C for
        # lane-dense stores; for now fall back to a (rows, C) view (masked stores).
        lw, pack = C, 1
    else:
        pack = lw // C

    # Contiguous row-major reshape -> layout plumbing only (no data movement).
    x2d = x.reshape(rows * C // lw, lw)
    params3 = jnp.stack(
        [jnp.tile(scale, pack), jnp.tile(shift, pack), jnp.tile(thresh, pack)],
        axis=0,
    )  # (3, lw) f32

    nonsparse2d, sparse2d = _run_bn_sparse(
        x2d, params3,
        collect_intermediates=collect_intermediates,
        block_bytes=block_bytes,
    )

    post_sparse = sparse2d.reshape(N, L, C)

    full_outputs = {}
    if collect_intermediates:
        full_outputs["nonsparse_motifs"] = nonsparse2d.reshape(N, L, C)

    if manipulate_post_sparse is not None:
        post_sparse = manipulate_post_sparse(post_sparse)

    if collect_intermediates:
        full_outputs["post_sparse_motifs_only"] = post_sparse

    out = post_sparse
    if splicepoint_results is not None:
        out = jnp.concatenate([splicepoint_results, out], axis=2)

    if collect_intermediates:
        full_outputs["post_sparse"] = out

    return full_outputs, out


# ----------------------------------------------------------------------------
# Pure-JAX reference (for correctness checks)
# ----------------------------------------------------------------------------
def _reference(params, x, splicepoint_results=None):
    mean = params.running_mean.reshape(1, 1, -1)
    var = params.running_var.reshape(1, 1, -1)
    gamma = params.gamma.reshape(1, 1, -1)
    beta = params.beta.reshape(1, 1, -1)
    thr = params.thresholds.reshape(1, 1, -1)
    y = (x - mean) / jnp.sqrt(var + params.eps) * gamma + beta
    s = jnp.where(y > thr, y, 0.0)
    out = s
    if splicepoint_results is not None:
        out = jnp.concatenate([splicepoint_results, s], axis=2)
    return y, s, out


if __name__ == "__main__":
    # Small shapes: batch=2, seq=16, num_motifs=32, 2 splicepoint channels.
    N, L, C = 2, 16, 32
    key = jax.random.PRNGKey(0)
    kx, ks = jax.random.split(key)
    x = jax.random.normal(kx, (N, L, C), jnp.float32)
    splicepoint_results = jax.random.normal(ks, (N, L, 2), jnp.float32)

    params = SparsityEnforcerParams(num_motifs=C, affine=False, seed=0)
    ref_nonsparse, ref_sparse, ref_out = _reference(params, x, splicepoint_results)

    # Path 1: collect intermediates (two-output kernel, lane-packed to lw=1024).
    full_outputs, out = sparsity_enforcer_forward(
        params, x, splicepoint_results=splicepoint_results,
        manipulate_post_sparse=None, collect_intermediates=True)
    out = jax.block_until_ready(out)
    assert out.shape == (N, L, C + 2), out.shape
    assert jnp.allclose(out, ref_out, atol=1e-5, rtol=1e-5), "post_sparse mismatch"
    assert set(full_outputs) == {"nonsparse_motifs", "post_sparse_motifs_only", "post_sparse"}
    assert jnp.allclose(full_outputs["nonsparse_motifs"], ref_nonsparse,
                        atol=1e-5, rtol=1e-5), "nonsparse mismatch"
    assert jnp.allclose(full_outputs["post_sparse_motifs_only"], ref_sparse,
                        atol=1e-5, rtol=1e-5), "sparse-only mismatch"

    # Path 2: inference-only with splicepoint (fused concat kernel).
    empty_outputs, out2 = sparsity_enforcer_forward(
        params, x, splicepoint_results=splicepoint_results,
        manipulate_post_sparse=None, collect_intermediates=False)
    out2 = jax.block_until_ready(out2)
    assert empty_outputs == {}
    assert out2.shape == (N, L, C + 2)
    assert jnp.allclose(out2, ref_out, atol=1e-5, rtol=1e-5), "fused-concat mismatch"

    # Path 3: C does not divide 128 -> lcm(40,128)=640 lane-packed view.
    C2 = 40
    params2 = SparsityEnforcerParams(num_motifs=C2, affine=False, seed=1)
    x2 = jax.random.normal(jax.random.PRNGKey(2), (N, L, C2), jnp.float32)
    _, _, ref_out2 = _reference(params2, x2, None)
    _, out3 = sparsity_enforcer_forward(
        params2, x2, splicepoint_results=None, collect_intermediates=False)
    out3 = jax.block_until_ready(out3)
    assert out3.shape == (N, L, C2)
    assert jnp.allclose(out3, ref_out2, atol=1e-5, rtol=1e-5), "lcm-path mismatch"

    # Path 4: force a multi-block grid with a partial last block (tiny block_bytes).
    N4, L4 = 2, 528                       # rows2 = 33 at lw=1024 -> 5 blocks, partial tail
    x4 = jax.random.normal(jax.random.PRNGKey(3), (N4, L4, C), jnp.float32)
    _, ref_sparse4, _ = _reference(params, x4, None)
    _, out4 = sparsity_enforcer_forward(
        params, x4, splicepoint_results=None, collect_intermediates=False,
        block_bytes=8 * 1024)
    out4 = jax.block_until_ready(out4)
    assert jnp.allclose(out4, ref_sparse4, atol=1e-5, rtol=1e-5), "multi-block mismatch"

    # Path 5: fused concat with multi-block grid and partial last block.
    N5, L5 = 2, 17                        # rows = 34 -> 5 blocks of 8 rows, partial tail
    x5 = jax.random.normal(jax.random.PRNGKey(4), (N5, L5, C), jnp.float32)
    sp5 = jax.random.normal(jax.random.PRNGKey(5), (N5, L5, 2), jnp.float32)
    _, _, ref_out5 = _reference(params, x5, sp5)
    _, out5 = sparsity_enforcer_forward(
        params, x5, splicepoint_results=sp5, collect_intermediates=False,
        block_bytes=1024)
    out5 = jax.block_until_ready(out5)
    assert jnp.allclose(out5, ref_out5, atol=1e-5, rtol=1e-5), "fused multi-block mismatch"

    print("KERNEL_OK")
</pallas_src>

<mosaic_0001>
module attributes {stable_mosaic.version = 11 : i64} {
  func.func @_bn_sparse_kernel(%arg0: i32, %arg1: memref<1x1024xf32, #tpu.memory_space<vmem>>, %arg2: memref<3x1024xf32, #tpu.memory_space<vmem>>, %arg3: memref<1x1024xf32, #tpu.memory_space<vmem>>, %arg4: memref<1x1024xf32, #tpu.memory_space<vmem>>) attributes {dimension_semantics = [#tpu.dimension_semantics<parallel>], iteration_bounds = array<i64: 1>, scalar_prefetch = 0 : i64, scratch_operands = 0 : i64, tpu.core_type = #tpu.core_type<tc>, window_params = [{transform_indices = @transform_0, window_bounds = array<i64: 1, 1024>}, {pipeline_mode = #tpu.pipeline_mode<synchronous>, transform_indices = @transform_1, window_bounds = array<i64: 3, 1024>}, {transform_indices = @transform_2, window_bounds = array<i64: 1, 1024>}, {transform_indices = @transform_3, window_bounds = array<i64: 1, 1024>}]} {
    %c0 = arith.constant 0 : index
    %c0_0 = arith.constant 0 : index
    %0 = vector.load %arg1[%c0, %c0_0] : memref<1x1024xf32, #tpu.memory_space<vmem>>, vector<1x1024xf32>
    %c0_1 = arith.constant 0 : index
    %c0_2 = arith.constant 0 : index
    %1 = vector.load %arg2[%c0_1, %c0_2] : memref<3x1024xf32, #tpu.memory_space<vmem>>, vector<1x1024xf32>
    %2 = arith.mulf %0, %1 : vector<1x1024xf32>
    %c1 = arith.constant 1 : index
    %c0_3 = arith.constant 0 : index
    %3 = vector.load %arg2[%c1, %c0_3] : memref<3x1024xf32, #tpu.memory_space<vmem>>, vector<1x1024xf32>
    %4 = arith.addf %2, %3 : vector<1x1024xf32>
    %c0_4 = arith.constant 0 : index
    %c0_5 = arith.constant 0 : index
    %5 = vector.load %arg3[%c0_4, %c0_5] : memref<1x1024xf32, #tpu.memory_space<vmem>>, vector<1x1024xf32>
    tpu.vector_store %arg3[%c0_4, %c0_5], %4 {strides = array<i32>} : memref<1x1024xf32, #tpu.memory_space<vmem>>, vector<1x1024xf32>,
    %c2 = arith.constant 2 : index
    %c0_6 = arith.constant 0 : index
    %6 = vector.load %arg2[%c2, %c0_6] : memref<3x1024xf32, #tpu.memory_space<vmem>>, vector<1x1024xf32>
    %7 = arith.cmpf ogt, %4, %6 : vector<1x1024xf32>
    %cst = arith.constant 0.000000e+00 : f32
    %8 = vector.broadcast %cst : f32 to vector<1x1024xf32>
    %9 = arith.select %7, %4, %8 : vector<1x1024xi1>, vector<1x1024xf32>
    %c0_7 = arith.constant 0 : index
    %c0_8 = arith.constant 0 : index
    %10 = vector.load %arg4[%c0_7, %c0_8] : memref<1x1024xf32, #tpu.memory_space<vmem>>, vector<1x1024xf32>
    tpu.vector_store %arg4[%c0_7, %c0_8], %9 {strides = array<i32>} : memref<1x1024xf32, #tpu.memory_space<vmem>>, vector<1x1024xf32>,
    return
  }
  func.func @transform_0(%arg0: i32) -> (i32, i32) {
    %c0_i32 = arith.constant 0 : i32
    %c0_i32_0 = arith.constant 0 : i32
    return %arg0, %c0_i32 : i32, i32
  }
  func.func @transform_1(%arg0: i32) -> (i32, i32) {
    %c0_i32 = arith.constant 0 : i32
    %c0_i32_0 = arith.constant 0 : i32
    %c0_i32_1 = arith.constant 0 : i32
    return %c0_i32, %c0_i32_0 : i32, i32
  }
  func.func @transform_2(%arg0: i32) -> (i32, i32) {
    %c0_i32 = arith.constant 0 : i32
    %c0_i32_0 = arith.constant 0 : i32
    return %arg0, %c0_i32 : i32, i32
  }
  func.func @transform_3(%arg0: i32) -> (i32, i32) {
    %c0_i32 = arith.constant 0 : i32
    %c0_i32_0 = arith.constant 0 : i32
    return %arg0, %c0_i32 : i32, i32
  }
}

</mosaic_0001>

<llo_original>
// kernel: tpu_custom_call.1
$region0: #{tpu_custom_call.1}
  #allocation0 [shape = 'u32[]', space=smem, size = 0x4, offset = 0x4, fixed_abs, tag = 'smem constant byte address 0x4 - core index']
  #allocation1 [shape = 'u32[72,128]{1,0:T(1,128)}', space=vmem, size = 0x9000, scoped, tag = 'internal scratch']
  %s0 = inlined_call_operand.hbm [shape: f32[1,1024], index: 0, kind: input, shape index: {}]
  %s1 = inlined_call_operand.hbm [shape: f32[3,1024], index: 1, kind: input, shape index: {}]
  %s2 = inlined_call_operand.hbm [shape: f32[1,1024], index: 2, kind: output, shape index: {0}]
  %s3 = inlined_call_operand.hbm [shape: f32[1,1024], index: 3, kind: output, shape index: {1}]
  %4 = xla_tuple %s2, %s3
  %s5 = sld [smem:[#allocation0]]
  $region34: #{tpu_custom_call.1} parent=0
    _
  %s7 = ssub.s32 1, %s5
  %s8 = scalar_select 0, %s7, %s5
  $region1: #{tpu_custom_call.1} parent=0
    #allocation2 [shape = 'u8[4096]{0}', space=vmem, size = 0x1000, scoped, tag = 'input window, operand 0, single buffered']
    #allocation3 [shape = 's32[1]{0}', space=sflag, size = 0x4, scoped, tag = 'scoped memory for tpu_custom_call.1']
    #allocation4 [shape = 's32[1]{0}', space=sflag, size = 0x4, scoped, tag = 'scoped memory for tpu_custom_call.1']
    #allocation5 [shape = 'u8[16384]{0}', space=vmem, size = 0x4000, scoped, tag = 'input window, operand 1, single buffered']
    #allocation6 [shape = 's32[1]{0}', space=sflag, size = 0x4, scoped, tag = 'scoped memory for tpu_custom_call.1']
    #allocation7 [shape = 'u8[4096]{0}', space=vmem, size = 0x1000, scoped, tag = 'output window, operand 0, single buffered']
    #allocation8 [shape = 'u8[4096]{0}', space=vmem, size = 0x1000, scoped, tag = 'output window, operand 1, single buffered']
    #allocation9 [shape = 's32[1]{0}', space=sflag, size = 0x4, scoped, tag = 'scoped memory for tpu_custom_call.1']
    %9 = vsyncpa [#allocation3], 0
    %10 = vsyncpa [#allocation6], 0
    %11 = vsyncpa [#allocation4], 0
    %12 = vsyncpa [#allocation9], 0
    // Predicated region
    $region2: #{tpu_custom_call.1} parent=1 // pred_check
      _
    $region3: #{tpu_custom_call.1} parent=1 // pred_check_branch
      %14 = sbr.rel (0) target = $region5
    $region4: #{tpu_custom_call.1} parent=1 // pred_region
      %16 = vsyncadd [#allocation3], 0
      %s18 = sshll.u32 %s0, 4
      %s19 = int_to_ptr.hbm [resolvable:$true] %s18
      %s20 = sshll.u32 [#allocation2], 4
      %s21 = int_to_ptr.vmem [resolvable:$true] %s20
      %23 = dma.hbm_to_vmem [thread:$0]  %s19, 128, %s21, [#allocation3]
    $region5: #{tpu_custom_call.1} parent=1 // pred_fallthru
      _
    // Predicated region
    $region6: #{tpu_custom_call.1} parent=1 // pred_check
      _
    $region7: #{tpu_custom_call.1} parent=1 // pred_check_branch
      %25 = sbr.rel (0) target = $region9
    $region8: #{tpu_custom_call.1} parent=1 // pred_region
      %27 = vsyncadd [#allocation6], 0
      %s29 = sshll.u32 %s1, 4
      %s30 = int_to_ptr.hbm [resolvable:$true] %s29
      %s31 = sshll.u32 [#allocation5], 4
      %s32 = int_to_ptr.vmem [resolvable:$true] %s31
      %34 = dma.hbm_to_vmem [thread:$0]  %s30, 512, %s32, [#allocation6]
    $region9: #{tpu_custom_call.1} parent=1 // pred_fallthru
      _
    // Predicated region
    $region10: #{tpu_custom_call.1} parent=1 // pred_check
      _
    $region11: #{tpu_custom_call.1} parent=1 // pred_check_branch
      %36 = sbr.rel (0) target = $region13
    $region12: #{tpu_custom_call.1} parent=1 // pred_region
      %38 = dma.done [#allocation3], 128
    $region13: #{tpu_custom_call.1} parent=1 // pred_fallthru
      _
    // Predicated region
    $region14: #{tpu_custom_call.1} parent=1 // pred_check
      _
    $region15: #{tpu_custom_call.1} parent=1 // pred_check_branch
      %40 = sbr.rel (0) target = $region17
    $region16: #{tpu_custom_call.1} parent=1 // pred_region
      %42 = dma.done [#allocation6], 512
    $region17: #{tpu_custom_call.1} parent=1 // pred_fallthru
      _
    %v43 = vld [vmem:[#allocation2] sm:$0xff]
    %v44 = vld [vmem:[#allocation5] ss:$4 sm:$0xff]
    %v45 = vmul.f32 %v43, %v44
    %s46 = scalar_lea.vmem [#allocation5], 1
    %v47 = vld [vmem:[%s46] ss:$4 sm:$0xff]
    %v48 = vadd.f32 %v45, %v47
    %49 = vst [vmem:[#allocation7] sm:$0xff] %v48
    %s50 = scalar_lea.vmem [#allocation5], 2
    %v51 = vld [vmem:[%s50] ss:$4 sm:$0xff]
    %vm52 = vcmp.gt.f32.partialorder %v48, %v51
    %v53 = vsel %vm52, %v48, 0.0
    %54 = vst [vmem:[#allocation8] sm:$0xff] %v53
    // Predicated region
    $region18: #{tpu_custom_call.1} parent=1 // pred_check
      _
    $region19: #{tpu_custom_call.1} parent=1 // pred_check_branch
      %56 = sbr.rel (0) target = $region21
    $region20: #{tpu_custom_call.1} parent=1 // pred_region
      %58 = vsyncadd [#allocation4], 0
      %s60 = sshll.u32 [#allocation7], 4
      %s61 = int_to_ptr.vmem [resolvable:$true] %s60
      %s62 = sshll.u32 %s2, 4
      %s63 = int_to_ptr.hbm [resolvable:$true] %s62
      %65 = dma.vmem_to_hbm [thread:$0]  %s61, 128, %s63, [#allocation4]
    $region21: #{tpu_custom_call.1} parent=1 // pred_fallthru
      _
    // Predicated region
    $region22: #{tpu_custom_call.1} parent=1 // pred_check
      _
    $region23: #{tpu_custom_call.1} parent=1 // pred_check_branch
      %67 = sbr.rel (0) target = $region25
    $region24: #{tpu_custom_call.1} parent=1 // pred_region
      %69 = vsyncadd [#allocation9], 0
      %s71 = sshll.u32 [#allocation8], 4
      %s72 = int_to_ptr.vmem [resolvable:$true] %s71
      %s73 = sshll.u32 %s3, 4
      %s74 = int_to_ptr.hbm [resolvable:$true] %s73
      %76 = dma.vmem_to_hbm [thread:$0]  %s72, 128, %s74, [#allocation9]
    $region25: #{tpu_custom_call.1} parent=1 // pred_fallthru
      _
    // Predicated region
    $region26: #{tpu_custom_call.1} parent=1 // pred_check
      _
    $region27: #{tpu_custom_call.1} parent=1 // pred_check_branch
      %78 = sbr.rel (0) target = $region29
    $region28: #{tpu_custom_call.1} parent=1 // pred_region
      %80 = dma.done [#allocation4], 128
    $region29: #{tpu_custom_call.1} parent=1 // pred_fallthru
      _
    // Predicated region
    $region30: #{tpu_custom_call.1} parent=1 // pred_check
      _
    $region31: #{tpu_custom_call.1} parent=1 // pred_check_branch
      %82 = sbr.rel (0) target = $region33
    $region32: #{tpu_custom_call.1} parent=1 // pred_region
      %84 = dma.done [#allocation9], 128
    $region33: #{tpu_custom_call.1} parent=1 // pred_fallthru
      _
    %85 = vsyncpa [#allocation3], 1
    %86 = vsyncpa [#allocation6], 1
    %87 = vsyncpa [#allocation4], 1
    %88 = vsyncpa [#allocation9], 1

</llo_original>
